<compile_context>
chip_gen: v5e
topology: v5e:2x2
jax: 0.10.0
libtpu: 0.0.40
codegen_flags: <defaults>
</compile_context>

<pallas_src>
import functools

import jax
import jax.numpy as jnp
from jax.experimental import pallas as pl
from jax.experimental.pallas import tpu as pltpu


def _round_up(x, m):
    return ((x + m - 1) // m) * m


def _vmem_capacity_bytes():
    """Physical VMEM of the current chip; conservative fallback if unqueryable."""
    try:
        return int(pltpu.get_tpu_info().vmem_capacity_bytes)
    except Exception:
        return 64 * 1024 * 1024  # v7x-sized; safe lower bound for v5e/v6e as well


def _fused_linear_relu_kernel(x_ref, w_ref, b_ref, o_ref):
    # x_ref: (tm, K)  tile of one field's batch rows (native dtype)
    # w_ref: (K, N)   that field's weight, already transposed, compute dtype
    # b_ref: (1, N)   bias row, float32
    # o_ref: (tm, N)
    x = x_ref[...]
    w = w_ref[...]
    if x.dtype != w.dtype:
        x = x.astype(w.dtype)          # in-kernel cast: no extra HBM pass over x
    y = jnp.dot(x, w, preferred_element_type=jnp.float32)
    y = y + b_ref[...]
    o_ref[...] = jnp.maximum(y, 0.0).astype(o_ref.dtype)


@functools.partial(jax.jit, static_argnames=("block_m",))
def fused_linear_relu(x_stack, wt_stack, b_stack, *, block_m=1024):
    """y[f] = relu(x[f] @ wt[f] + b[f]) for all fields in one pallas_call.

    x_stack:  (F, M, K)            activations (any float dtype)
    wt_stack: (F, K, N)            weights, transposed to (in, out), MXU dtype
    b_stack:  (F, N) or (F, 1, N)  float32 bias
    returns   (F, M, N)            in x_stack.dtype
    """
    F, M, K = x_stack.shape
    N = wt_stack.shape[2]
    if b_stack.ndim == 2:
        b_stack = b_stack[:, None, :]

    x_it = jnp.dtype(x_stack.dtype).itemsize
    w_it = jnp.dtype(wt_stack.dtype).itemsize
    b_it = jnp.dtype(b_stack.dtype).itemsize
    o_it = x_it                                     # output keeps the activation dtype

    # --- VMEM-aware batch-tile sizing (real itemsizes, real buffer counts). ---
    cap = _vmem_capacity_bytes()
    budget = cap // 2                               # headroom for compiler scratch
    fixed = 2 * K * N * w_it + 2 * N * b_it         # double-buffered W + bias
    per_row = 2 * K * x_it + 2 * N * o_it           # double-buffered x row + out row
    tm_cap = max(8, ((budget - fixed) // per_row) // 8 * 8) if budget > fixed else 8
    tm = max(8, min(block_m, _round_up(M, 8), tm_cap))

    # v7x has 2 TensorCores: make sure the 'parallel' grid has >= 2 points.
    if F * pl.cdiv(M, tm) < 2 and M > 8:
        tm = max(8, _round_up(pl.cdiv(M, 2), 8))

    grid = (F, pl.cdiv(M, tm))                      # ragged last M block is masked

    footprint = fixed + tm * per_row
    vmem_limit = int(min(cap * 9 // 10, max(2 * footprint + (4 << 20), 32 << 20)))

    cost = pl.CostEstimate(
        flops=2 * F * M * N * K,
        transcendentals=0,
        bytes_accessed=(x_stack.size * x_it + wt_stack.size * w_it
                        + b_stack.size * b_it + F * M * N * o_it),
    )

    return pl.pallas_call(
        _fused_linear_relu_kernel,
        out_shape=jax.ShapeDtypeStruct((F, M, N), x_stack.dtype),
        grid_spec=pltpu.PrefetchScalarGridSpec(
            num_scalar_prefetch=0,
            grid=grid,
            in_specs=[
                pl.BlockSpec((None, tm, K), lambda f, i: (f, i, 0)),  # x tile
                pl.BlockSpec((None, K, N), lambda f, i: (f, 0, 0)),   # W (transposed)
                pl.BlockSpec((None, 1, N), lambda f, i: (f, 0, 0)),   # bias
            ],
            out_specs=pl.BlockSpec((None, tm, N), lambda f, i: (f, i, 0)),
        ),
        compiler_params=pltpu.CompilerParams(
            dimension_semantics=("parallel", "parallel"),
            vmem_limit_bytes=vmem_limit,
        ),
        cost_estimate=cost,
    )(x_stack, wt_stack, b_stack)


class AttentionAblationPallas:
    """JAX/Pallas mirror of the PyTorch AttentionAblation module (eval mode).

    The PyTorch reference hard-codes nn.ReLU (its `activation` arg is unused) and
    Dropout is identity in eval(), so this matches forward semantics exactly.
    """

    def __init__(self, output_dim, input_dim, drop_rate, activation, text_field,
                 key, compute_dtype=jnp.bfloat16):
        del drop_rate, activation  # see class docstring
        self.fields = tuple(text_field)
        bound = 1.0 / (input_dim ** 0.5)
        ws, bs = [], []
        for i, _ in enumerate(self.fields):
            kw, kb = jax.random.split(jax.random.fold_in(key, i))
            ws.append(jax.random.uniform(kw, (output_dim, input_dim), jnp.float32,
                                         -bound, bound))
            bs.append(jax.random.uniform(kb, (output_dim,), jnp.float32,
                                         -bound, bound))
        # Reference copies, PyTorch layout (f32, (out, in)).
        self.w_stack_f32 = jnp.stack(ws)                       # (F, N, K)
        self.b_stack = jnp.stack(bs)[:, None, :]               # (F, 1, N) float32
        # Kernel copies: transposed ONCE to (F, K, N) and pre-cast to compute dtype.
        self.wt_stack = jnp.transpose(self.w_stack_f32, (0, 2, 1)).astype(compute_dtype)
        self._param_cache = {}

    def params(self, field):
        i = self.fields.index(field)
        return self.w_stack_f32[i], self.b_stack[i, 0]

    def _gathered(self, fields):
        # Per-call gather hoisted: cached per static field subset.
        if fields not in self._param_cache:
            if fields == self.fields:
                self._param_cache[fields] = (self.wt_stack, self.b_stack)
            else:
                idx = jnp.array([self.fields.index(f) for f in fields])
                self._param_cache[fields] = (self.wt_stack[idx], self.b_stack[idx])
        return self._param_cache[fields]

    def __call__(self, batch):
        fields = tuple(f for f in self.fields if f in batch)
        # TODO(synk): accept a pre-stacked (F, M, K) activation tensor to avoid this
        # per-call jnp.stack (an extra HBM pass for a memory-bound op).
        x_stack = jnp.stack([batch[f] for f in fields])        # (F, M, K)
        wt, b = self._gathered(fields)
        y = fused_linear_relu(x_stack, wt, b)
        return {f: y[i] for i, f in enumerate(fields)}


if __name__ == "__main__":
    key = jax.random.PRNGKey(0)
    k_model, k_data = jax.random.split(key)

    text_field = ["title", "abstract"]
    batch_size, input_dim, output_dim = 8, 32, 16

    model = AttentionAblationPallas(
        output_dim=output_dim,
        input_dim=input_dim,
        drop_rate=0.1,
        activation="relu",
        text_field=text_field,
        key=k_model,
    )  # bf16 compute by default

    batch = {
        f: jax.random.normal(jax.random.fold_in(k_data, i),
                             (batch_size, input_dim), jnp.float32)
        for i, f in enumerate(text_field)
    }

    out = model(batch)
    out = jax.tree_util.tree_map(jax.block_until_ready, out)

    ok = True
    # 1) Default bf16-compute path: compare against a bf16-rounded f32 reference.
    for field in text_field:
        w, b = model.params(field)
        x16 = batch[field].astype(jnp.bfloat16).astype(jnp.float32)
        w16 = w.astype(jnp.bfloat16).astype(jnp.float32)
        ref = jnp.maximum(x16 @ w16.T + b, 0.0)
        ok &= bool(jnp.allclose(out[field], ref, atol=1e-2, rtol=1e-2))
        ok &= out[field].shape == (batch_size, output_dim)

    # 2) Full-f32 path through the same kernel (exact PyTorch parity check).
    x_stack = jnp.stack([batch[f] for f in text_field])
    wt_f32 = jnp.transpose(model.w_stack_f32, (0, 2, 1))
    y32 = jax.block_until_ready(fused_linear_relu(x_stack, wt_f32, model.b_stack))
    for i, field in enumerate(text_field):
        w, b = model.params(field)
        ref = jnp.maximum(batch[field] @ w.T + b, 0.0)
        ok &= bool(jnp.allclose(y32[i], ref, atol=1e-5, rtol=1e-5))

    if ok:
        print("KERNEL_OK")
    else:
        print("KERNEL_MISMATCH")
</pallas_src>

<mosaic_0001>
module attributes {stable_mosaic.version = 11 : i64} {
  func.func @_fused_linear_relu_kernel(%arg0: i32, %arg1: i32, %arg2: memref<1x8x32xf32, #tpu.memory_space<vmem>>, %arg3: memref<1x32x16xbf16, #tpu.memory_space<vmem>>, %arg4: memref<1x1x16xf32, #tpu.memory_space<vmem>>, %arg5: memref<1x8x16xf32, #tpu.memory_space<vmem>>) attributes {dimension_semantics = [#tpu.dimension_semantics<parallel>, #tpu.dimension_semantics<parallel>], iteration_bounds = array<i64: 2, 1>, scalar_prefetch = 0 : i64, scratch_operands = 0 : i64, tpu.core_type = #tpu.core_type<tc>, window_params = [{transform_indices = @transform_0, window_bounds = array<i64: 1, 8, 32>}, {transform_indices = @transform_1, window_bounds = array<i64: 1, 32, 16>}, {transform_indices = @transform_2, window_bounds = array<i64: 1, 1, 16>}, {transform_indices = @transform_3, window_bounds = array<i64: 1, 8, 16>}]} {
    %c0 = arith.constant 0 : index
    %c0_0 = arith.constant 0 : index
    %c0_1 = arith.constant 0 : index
    %0 = vector.load %arg2[%c0, %c0_0, %c0_1] : memref<1x8x32xf32, #tpu.memory_space<vmem>>, vector<1x8x32xf32>
    %1 = vector.shape_cast %0 : vector<1x8x32xf32> to vector<8x32xf32>
    %c0_2 = arith.constant 0 : index
    %c0_3 = arith.constant 0 : index
    %c0_4 = arith.constant 0 : index
    %2 = vector.load %arg3[%c0_2, %c0_3, %c0_4] : memref<1x32x16xbf16, #tpu.memory_space<vmem>>, vector<1x32x16xbf16>
    %3 = vector.shape_cast %2 : vector<1x32x16xbf16> to vector<32x16xbf16>
    %4 = arith.truncf %1 : vector<8x32xf32> to vector<8x32xbf16>
    %cst = arith.constant dense<0.000000e+00> : vector<8x16xf32>
    %5 = tpu.matmul %4, %3, %cst {dimension_numbers = #tpu.dot_dimension_numbers<[1], [0], [0], [1], [0, 0, 1, 1], [], []>} : vector<8x32xbf16>, vector<32x16xbf16>, vector<8x16xf32> -> vector<8x16xf32>
    %c0_5 = arith.constant 0 : index
    %c0_6 = arith.constant 0 : index
    %c0_7 = arith.constant 0 : index
    %6 = vector.load %arg4[%c0_5, %c0_6, %c0_7] : memref<1x1x16xf32, #tpu.memory_space<vmem>>, vector<1x1x16xf32>
    %7 = vector.shape_cast %6 : vector<1x1x16xf32> to vector<1x16xf32>
    %8 = vector.broadcast %7 : vector<1x16xf32> to vector<8x16xf32>
    %9 = arith.addf %5, %8 : vector<8x16xf32>
    %cst_8 = arith.constant 0.000000e+00 : f32
    %10 = vector.broadcast %cst_8 : f32 to vector<8x16xf32>
    %11 = arith.maximumf %9, %10 : vector<8x16xf32>
    %c0_9 = arith.constant 0 : index
    %c0_10 = arith.constant 0 : index
    %c0_11 = arith.constant 0 : index
    %12 = vector.load %arg5[%c0_9, %c0_10, %c0_11] : memref<1x8x16xf32, #tpu.memory_space<vmem>>, vector<1x8x16xf32>
    %13 = vector.shape_cast %12 : vector<1x8x16xf32> to vector<8x16xf32>
    %14 = vector.shape_cast %11 : vector<8x16xf32> to vector<1x8x16xf32>
    tpu.vector_store %arg5[%c0_9, %c0_10, %c0_11], %14 {strides = array<i32>} : memref<1x8x16xf32, #tpu.memory_space<vmem>>, vector<1x8x16xf32>,
    return
  }
  func.func @transform_0(%arg0: i32, %arg1: i32) -> (i32, i32, i32) {
    %c0_i32 = arith.constant 0 : i32
    %c0_i32_0 = arith.constant 0 : i32
    return %arg0, %arg1, %c0_i32 : i32, i32, i32
  }
  func.func @transform_1(%arg0: i32, %arg1: i32) -> (i32, i32, i32) {
    %c0_i32 = arith.constant 0 : i32
    %c0_i32_0 = arith.constant 0 : i32
    %c0_i32_1 = arith.constant 0 : i32
    return %arg0, %c0_i32, %c0_i32_0 : i32, i32, i32
  }
  func.func @transform_2(%arg0: i32, %arg1: i32) -> (i32, i32, i32) {
    %c0_i32 = arith.constant 0 : i32
    %c0_i32_0 = arith.constant 0 : i32
    %c0_i32_1 = arith.constant 0 : i32
    return %arg0, %c0_i32, %c0_i32_0 : i32, i32, i32
  }
  func.func @transform_3(%arg0: i32, %arg1: i32) -> (i32, i32, i32) {
    %c0_i32 = arith.constant 0 : i32
    %c0_i32_0 = arith.constant 0 : i32
    return %arg0, %arg1, %c0_i32 : i32, i32, i32
  }
}

</mosaic_0001>

<llo_original>
// kernel: fused_linear_relu.1
$region0: #{fused_linear_relu.1}
  #allocation0 [shape = 'u32[]', space=smem, size = 0x4, offset = 0x4, fixed_abs, tag = 'smem constant byte address 0x4 - core index']
  #allocation1 [shape = 'u32[72,128]{1,0:T(1,128)}', space=vmem, size = 0x9000, scoped, tag = 'internal scratch']
  %s0 = inlined_call_operand.vmem [shape: f32[2,8,32], index: 0, kind: input, shape index: {}]
  %s1 = inlined_call_operand.vmem [shape: bf16[2,32,16], index: 1, kind: input, shape index: {}]
  %s2 = inlined_call_operand.vmem [shape: f32[2,1,16], index: 2, kind: input, shape index: {}]
  %s3 = inlined_call_operand.hbm [shape: f32[2,8,16], index: 3, kind: output, shape index: {}]
  %s4 = sld [smem:[#allocation0]]
  $region45: #{fused_linear_relu.1} parent=0
    _
  %s6 = ssub.s32 1, %s4
  %s7 = scalar_select 0, %s6, %s4
  $region1: #{fused_linear_relu.1} parent=0
    #allocation2 [shape = 'u8[8192]{0}', space=vmem, size = 0x2000, scoped, tag = 'output window, operand 0']
    #allocation3 [shape = 's32[2]{0}', space=sflag, size = 0x8, scoped, tag = 'scoped memory for fused_linear_relu.1']
    %8 = vsyncpa [#allocation3], 0
    %s9 = scalar_lea.sflag [#allocation3], 1
    %10 = vsyncpa %s9, 0
    loop: start=0, step=1, limit=4
    $region2: #{fused_linear_relu.1} parent=1 // loop_pre_header
      _
    $region3: #{fused_linear_relu.1} parent=1 // loop_header
      %s12 = sphi 0, %s16
      %p13 = scmp.ge.s32.totalorder %s12, 4
      %s19 = sphi 0, %s31
      %s20 = sphi 0, %s27
      %s21 = sphi 0, %s19
      %s22 = sphi 0, %s20
      %s23 = sphi 0, %s21
      %s24 = sphi 0, %s22
      %s36 = sphi 0, %s38
      %s39 = sphi 0, %s36
      %s40 = sphi 0, %s39
      %s56 = sphi 0, %s40
      %s62 = sphi 0, %s64
      %s65 = sphi 0, %s62
      %s66 = sphi 0, %s65
      %s82 = sphi 0, %s66
      %s88 = sphi 0, %s90
      %s91 = sphi 0, %s88
      %s92 = sphi 0, %s91
      %s108 = sphi 0, %s92
      %s116 = sphi 0, %s118
      %s119 = sphi 0, %s116
      %s120 = sphi 0, %s119
      %s136 = sphi 0, %s120
    $region4: #{fused_linear_relu.1} parent=1 // loop_header_branch
      %15 = sbr.rel (%p13) target = $region8
    $region5: #{fused_linear_relu.1} parent=1 // loop_body
      %s17 = ssub.s32 %s12, 1
      %s18 = ssub.s32 %s12, 2
      %s25 = sadd.s32 1, %s20
      %p26 = scmp.ge.s32.totalorder %s25, 1
      %s27 = scalar_select %p26, 0, %s25
      %s28 = sadd.s32 1, %s19
      %s29 = scalar_select %p26, %s28, %s19
      %p30 = scmp.ge.s32.totalorder %s29, 2
      %s31 = scalar_select %p30, 0, %s29
      %s32 = ssub.s32 %s19, %s31
      %s33 = ssub.s32 %s20, %s27
      %s34 = sor.u32 %s32, %s33
      %p35 = scmp.eq.s32.totalorder %s34, 0
      %s37 = sadd.s32 %s36, 1
      %s38 = scalar_select %p35, %s36, %s37
      %p41 = pneg %p35
      %p42 = scmp.eq.s32.totalorder %s12, 1
      %p43 = por %p41, %p42
      %p44 = scmp.ne.s32.totalorder %s36, %s39
      %p45 = scmp.eq.s32.totalorder %s12, 0
      %p46 = por %p44, %p45
      %p47 = scmp.ne.s32.totalorder %s36, %s39
      %p48 = scmp.eq.s32.totalorder %s17, 1
      %p49 = por %p47, %p48
      %p50 = scmp.ne.s32.totalorder %s39, %s40
      %p51 = scmp.eq.s32.totalorder %s17, 0
      %p52 = por %p50, %p51
      %p53 = scmp.ne.s32.totalorder %s39, %s40
      %p54 = scmp.eq.s32.totalorder %s18, 1
      %p55 = por %p53, %p54
      %p57 = scmp.ne.s32.totalorder %s40, %s56
      %p58 = scmp.eq.s32.totalorder %s18, 0
      %p59 = por %p57, %p58
      %s60 = ssub.s32 %s19, %s31
      %p61 = scmp.eq.s32.totalorder %s60, 0
      %s63 = sadd.s32 %s62, 1
      %s64 = scalar_select %p61, %s62, %s63
      %p67 = pneg %p61
      %p68 = scmp.eq.s32.totalorder %s12, 1
      %p69 = por %p67, %p68
      %p70 = scmp.ne.s32.totalorder %s62, %s65
      %p71 = scmp.eq.s32.totalorder %s12, 0
      %p72 = por %p70, %p71
      %p73 = scmp.ne.s32.totalorder %s62, %s65
      %p74 = scmp.eq.s32.totalorder %s17, 1
      %p75 = por %p73, %p74
      %p76 = scmp.ne.s32.totalorder %s65, %s66
      %p77 = scmp.eq.s32.totalorder %s17, 0
      %p78 = por %p76, %p77
      %p79 = scmp.ne.s32.totalorder %s65, %s66
      %p80 = scmp.eq.s32.totalorder %s18, 1
      %p81 = por %p79, %p80
      %p83 = scmp.ne.s32.totalorder %s66, %s82
      %p84 = scmp.eq.s32.totalorder %s18, 0
      %p85 = por %p83, %p84
      %s86 = ssub.s32 %s19, %s31
      %p87 = scmp.eq.s32.totalorder %s86, 0
      %s89 = sadd.s32 %s88, 1
      %s90 = scalar_select %p87, %s88, %s89
      %p93 = pneg %p87
      %p94 = scmp.eq.s32.totalorder %s12, 1
      %p95 = por %p93, %p94
      %p96 = scmp.ne.s32.totalorder %s88, %s91
      %p97 = scmp.eq.s32.totalorder %s12, 0
      %p98 = por %p96, %p97
      %p99 = scmp.ne.s32.totalorder %s88, %s91
      %p100 = scmp.eq.s32.totalorder %s17, 1
      %p101 = por %p99, %p100
      %p102 = scmp.ne.s32.totalorder %s91, %s92
      %p103 = scmp.eq.s32.totalorder %s17, 0
      %p104 = por %p102, %p103
      %p105 = scmp.ne.s32.totalorder %s91, %s92
      %p106 = scmp.eq.s32.totalorder %s18, 1
      %p107 = por %p105, %p106
      %p109 = scmp.ne.s32.totalorder %s92, %s108
      %p110 = scmp.eq.s32.totalorder %s18, 0
      %p111 = por %p109, %p110
      %s112 = ssub.s32 %s19, %s31
      %s113 = ssub.s32 %s20, %s27
      %s114 = sor.u32 %s112, %s113
      %p115 = scmp.eq.s32.totalorder %s114, 0
      %s117 = sadd.s32 %s116, 1
      %s118 = scalar_select %p115, %s116, %s117
      %p121 = pneg %p115
      %p122 = scmp.eq.s32.totalorder %s12, 1
      %p123 = por %p121, %p122
      %p124 = scmp.ne.s32.totalorder %s116, %s119
      %p125 = scmp.eq.s32.totalorder %s12, 0
      %p126 = por %p124, %p125
      %p127 = scmp.ne.s32.totalorder %s116, %s119
      %p128 = scmp.eq.s32.totalorder %s17, 1
      %p129 = por %p127, %p128
      %p130 = scmp.ne.s32.totalorder %s119, %s120
      %p131 = scmp.eq.s32.totalorder %s17, 0
      %p132 = por %p130, %p131
      %p133 = scmp.ne.s32.totalorder %s119, %s120
      %p134 = scmp.eq.s32.totalorder %s18, 1
      %p135 = por %p133, %p134
      %p137 = scmp.ne.s32.totalorder %s120, %s136
      %p138 = scmp.eq.s32.totalorder %s18, 0
      %p139 = por %p137, %p138
      %p140 = scmp.le.s32.totalorder 1, %s12
      %p141 = scmp.lt.s32.totalorder %s12, 3
      %p142 = pnand %p140, %p141
      %p143 = pneg %p142
      // Predicated region
      $region9: #{fused_linear_relu.1} parent=5 // pred_check
        _
      $region10: #{fused_linear_relu.1} parent=5 // pred_check_branch
        %145 = sbr.rel (%p142) target = $region12
      $region11: #{fused_linear_relu.1} parent=5 // pred_region
        %s146 = ssub.s32 %s12, 1
      $region12: #{fused_linear_relu.1} parent=5 // pred_fallthru
        _
      %p147 = scmp.lt.s32.totalorder %s12, 2
      // Predicated region
      $region13: #{fused_linear_relu.1} parent=5 // pred_check
        %p148 = pneg %p147
      $region14: #{fused_linear_relu.1} parent=5 // pred_check_branch
        %150 = sbr.rel (%p148) target = $region16
      $region15: #{fused_linear_relu.1} parent=5 // pred_region
        // Predicated region
        $region17: #{fused_linear_relu.1} parent=15 // pred_check
          %p151 = pneg %p46
        $region18: #{fused_linear_relu.1} parent=15 // pred_check_branch
          %153 = sbr.rel (%p151) target = $region20
        $region19: #{fused_linear_relu.1} parent=15 // pred_region
          %p154 = scmp.lt.s32.totalorder %s19, 1
          %s155 = scalar_select %p154, %s19, 1
          %p156 = scmp.lt.s32.totalorder %s20, 0
          %s157 = scalar_select %p156, %s20, 0
          %s158 = sadd.s32 %s157, %s155
          %s159 = smul.addr %s158, 8
          %s160 = scalar_lea.vmem %s0, %s159
        $region20: #{fused_linear_relu.1} parent=15 // pred_fallthru
          _
        // Predicated region
        $region21: #{fused_linear_relu.1} parent=15 // pred_check
          %p161 = pneg %p72
        $region22: #{fused_linear_relu.1} parent=15 // pred_check_branch
          %163 = sbr.rel (%p161) target = $region24
        $region23: #{fused_linear_relu.1} parent=15 // pred_region
          %p164 = scmp.lt.s32.totalorder %s19, 1
          %s165 = scalar_select %p164, %s19, 1
          %s166 = smul.addr %s165, 4
          %s167 = smul.addr %s166, 4
          %s168 = scalar_lea.vmem %s1, %s167
        $region24: #{fused_linear_relu.1} parent=15 // pred_fallthru
          _
        // Predicated region
        $region25: #{fused_linear_relu.1} parent=15 // pred_check
          %p169 = pneg %p98
        $region26: #{fused_linear_relu.1} parent=15 // pred_check_branch
          %171 = sbr.rel (%p169) target = $region28
        $region27: #{fused_linear_relu.1} parent=15 // pred_region
          %p172 = scmp.lt.s32.totalorder %s19, 1
          %s173 = scalar_select %p172, %s19, 1
          %s174 = scalar_lea.vmem %s2, %s173
        $region28: #{fused_linear_relu.1} parent=15 // pred_fallthru
          _
      $region16: #{fused_linear_relu.1} parent=5 // pred_fallthru
        _
      %p175 = scmp.le.s32.totalorder 1, %s12
      %p176 = scmp.lt.s32.totalorder %s12, 3
      %p177 = pnand %p175, %p176
      %p178 = pneg %p177
      // Predicated region
      $region29: #{fused_linear_relu.1} parent=5 // pred_check
        _
      $region30: #{fused_linear_relu.1} parent=5 // pred_check_branch
        %180 = sbr.rel (%p177) target = $region32
      $region31: #{fused_linear_relu.1} parent=5 // pred_region
        %s181 = ssub.s32 %s12, 1
        %p182 = scmp.lt.s32.totalorder %s21, 1
        %s183 = scalar_select %p182, %s21, 1
        %p184 = scmp.lt.s32.totalorder %s22, 0
        %s185 = scalar_select %p184, %s22, 0
        %s186 = sadd.s32 %s185, %s183
        %s187 = smul.addr %s186, 8
        %s188 = scalar_lea.vmem %s0, %s187
        %p189 = pneg %p52
        %p190 = pneg %p49
        %p191 = scmp.lt.s32.totalorder %s21, 1
        %s192 = scalar_select %p191, %s21, 1
        %s193 = smul.addr %s192, 4
        %s194 = smul.addr %s193, 4
        %s195 = scalar_lea.vmem %s1, %s194
        %p196 = pneg %p78
        %p197 = pneg %p75
        %p198 = scmp.lt.s32.totalorder %s21, 1
        %s199 = scalar_select %p198, %s21, 1
        %s200 = scalar_lea.vmem %s2, %s199
        %p201 = pneg %p104
        %p202 = pneg %p101
        %p203 = pneg %p132
        %p204 = pneg %p129
        %s205 = sand.u32 %s119, 1
        %s206 = scalar_lea.sflag [#allocation3], %s205
        %s207 = sand.u32 %s119, 1
        %s208 = smul.addr %s207, 8
        %s209 = scalar_lea.vmem [#allocation2], %s208
        %p210 = scmp.lt.s32.totalorder %s21, 1
        %s211 = scalar_select %p210, %s21, 1
        %p212 = scmp.lt.s32.totalorder %s22, 0
        %s213 = scalar_select %p212, %s22, 0
        %s214 = sadd.s32 %s213, %s211
        %s215 = smul.addr %s214, 8
        %s216 = scalar_lea.vmem %s0, %s215
        %p217 = scmp.lt.s32.totalorder %s21, 1
        %s218 = scalar_select %p217, %s21, 1
        %s219 = smul.addr %s218, 4
        %s220 = smul.addr %s219, 4
        %s221 = scalar_lea.vmem %s1, %s220
        %p222 = scmp.lt.s32.totalorder %s21, 1
        %s223 = scalar_select %p222, %s21, 1
        %s224 = scalar_lea.vmem %s2, %s223
        %v226 = vld [vmem:[%s216] sm:$0xff]
        %v227 = vld [vmem:[%s221] sm:$0xf]
        %v228 = vld [vmem:[%s221 + $0x4] sm:$0xf]
        %v229 = vld [vmem:[%s221 + $0x8] sm:$0xf]
        %v230 = vld [vmem:[%s221 + $0xc] sm:$0xf]
        %v231 = vpack.c.bf16 %v226, %v226
        %v232 = vld [vmem:[%s224] sm:$0x1]
        %v234 = vperm.slane %v232, 0
        %v240 = vunpack.c.l.b16 %v227
        %v241 = vunpack.c.l.b16 %v228
        %v242 = vunpack.c.l.b16 %v229
        %v243 = vunpack.c.l.b16 %v230
        %v244 = vpack.c.b16 %v241, %v240
        %v245 = vpack.c.b16 %v243, %v242
        %vm248 = vcmask 261120
        %v250 = vsel %vm248, %v231, 0
        %252 = vmatpush.bf16.msra.mxu0 0
        %253 = vmatpush.bf16.msra.mxu0 0
        %254 = vmatpush.bf16.msra.mxu0 0
        %255 = vmatpush.bf16.msra.mxu0 0
        %256 = vmatpush.bf16.msra.mxu0 0
        %257 = vmatpush.bf16.msra.mxu0 0
        %258 = vmatpush.bf16.msra.mxu0 %v245
        %259 = vmatpush.bf16.msra.mxu0 %v244
        %260 = vmatmul.bf16.gmra.mxu0 %v250
        %v261 = vpop.f32.mrf.mxu0
        %v262 = vadd.f32 %v234, %v261
        %v263 = vpop.f32.mrf.mxu0
        %264 = vdwg.mxu0
        %v265 = vmax.f32 %v262, 0.0
        %vm266 = vcmask 130048
        %267 = vst.msk [vmem:[%s209] sm:$0xff] %vm266, %v265
        %s268 = sand.u32 %s119, 1
        %s269 = scalar_lea.sflag [#allocation3], %s268
        %s270 = sand.u32 %s119, 1
        %s271 = smul.addr %s270, 8
        %s272 = scalar_lea.vmem [#allocation2], %s271
        // Predicated region
        $region33: #{fused_linear_relu.1} parent=31 // pred_check
          %p273 = pneg %p129
        $region34: #{fused_linear_relu.1} parent=31 // pred_check_branch
          %275 = sbr.rel (%p273) target = $region36
        $region35: #{fused_linear_relu.1} parent=31 // pred_region
          %277 = vsyncadd %s269, 0
          %s278 = sadd.s32 %s22, %s21
          %s279 = smul.addr %s278, 8
          %s280 = scalar_lea.hbm %s3, %s279
          %s282 = sshll.u32 %s272, 4
          %s283 = int_to_ptr.vmem [resolvable:$true] %s282
          %s284 = sshll.u32 %s280, 4
          %s285 = int_to_ptr.hbm [resolvable:$true] %s284
          %287 = dma.vmem_to_hbm [thread:$0]  %s283, 128, %s285, %s269
        $region36: #{fused_linear_relu.1} parent=31 // pred_fallthru
          _
      $region32: #{fused_linear_relu.1} parent=5 // pred_fallthru
        _
      %p288 = scmp.le.s32.totalorder 2, %s12
      // Predicated region
      $region37: #{fused_linear_relu.1} parent=5 // pred_check
        %p289 = pneg %p288
      $region38: #{fused_linear_relu.1} parent=5 // pred_check_branch
        %291 = sbr.rel (%p289) target = $region40
      $region39: #{fused_linear_relu.1} parent=5 // pred_region
        %s292 = ssub.s32 %s12, 2
        // Predicated region
        $region41: #{fused_linear_relu.1} parent=39 // pred_check
          %p293 = pneg %p135
        $region42: #{fused_linear_relu.1} parent=39 // pred_check_branch
          %295 = sbr.rel (%p293) target = $region44
        $region43: #{fused_linear_relu.1} parent=39 // pred_region
          %s296 = sand.u32 %s120, 1
          %s297 = scalar_lea.sflag [#allocation3], %s296
          %s298 = sand.u32 %s120, 1
          %s299 = smul.addr %s298, 8
          %s300 = scalar_lea.vmem [#allocation2], %s299
          %302 = dma.done %s297, 128
        $region44: #{fused_linear_relu.1} parent=39 // pred_fallthru
          _
      $region40: #{fused_linear_relu.1} parent=5 // pred_fallthru
        _
    $region6: #{fused_linear_relu.1} parent=1 // loop_footer
      %s16 = sadd.s32 1, %s12
    $region7: #{fused_linear_relu.1} parent=1 // loop_footer_branch
      %11 = sbr.rel target = $region3
    $region8: #{fused_linear_relu.1} parent=1 // loop_exit
      _
    %303 = vsyncpa [#allocation3], 1
    %s304 = scalar_lea.sflag [#allocation3], 1
    %305 = vsyncpa %s304, 1

</llo_original>
